<compile_context>
chip_gen: v6e
topology: v6e:2x2x1
jax: 0.10.0
libtpu: 0.0.40
codegen_flags: <defaults>
</compile_context>

<pallas_src>
import functools

import jax
import jax.numpy as jnp
import numpy as np
from jax.experimental import pallas as pl
from jax.experimental.pallas import tpu as pltpu


def _round_up(x, m):
    return ((x + m - 1) // m) * m


def _vmem_capacity_bytes():
    try:
        return int(pltpu.get_tpu_info().vmem_capacity_bytes)
    except Exception:
        return 64 * 1024 * 1024  # conservative fallback (v7x per-TC VMEM)


# ---------------------------------------------------------------------------
# Kernels
# ---------------------------------------------------------------------------
def make_blockdiag_kernel(n_hidden, mxu_dtype):
    """Both Q nets packed side-by-side / block-diagonally: 3 matmuls total."""

    def kernel(*refs):
        if n_hidden > 0:
            x_ref, w0_ref, wh_ref, whead_ref, bh_ref, bhd_ref, out_ref = refs
        else:
            x_ref, w0_ref, whead_ref, bh_ref, bhd_ref, out_ref = refs
            wh_ref = None

        x = x_ref[...].astype(mxu_dtype)
        h = jnp.dot(x, w0_ref[...], preferred_element_type=jnp.float32)
        h = jnp.maximum(h + bh_ref[0:1, :], 0.0)
        for i in range(n_hidden):
            h = jnp.dot(h.astype(mxu_dtype), wh_ref[i],
                        preferred_element_type=jnp.float32)
            h = jnp.maximum(h + bh_ref[i + 1:i + 2, :], 0.0)
        q = jnp.dot(h.astype(mxu_dtype), whead_ref[...],
                    preferred_element_type=jnp.float32)
        out_ref[...] = (q + bhd_ref[...]).astype(out_ref.dtype)

    return kernel


def make_grouped_kernel(n_hidden, mxu_dtype):
    """Per-network (grouped) weights: 2 small matmuls per layer, no zero blocks."""

    def kernel(*refs):
        if n_hidden > 0:
            x_ref, w0_ref, wh_ref, whead_ref, bh_ref, bhd_ref, out_ref = refs
        else:
            x_ref, w0_ref, whead_ref, bh_ref, bhd_ref, out_ref = refs
            wh_ref = None

        x = x_ref[...].astype(mxu_dtype)
        q = None
        for g in range(2):                      # static unroll over the twin Q nets
            h = jnp.dot(x, w0_ref[g], preferred_element_type=jnp.float32)
            h = jnp.maximum(h + bh_ref[0, g:g + 1, :], 0.0)
            for i in range(n_hidden):
                h = jnp.dot(h.astype(mxu_dtype), wh_ref[i, g],
                            preferred_element_type=jnp.float32)
                h = jnp.maximum(h + bh_ref[i + 1, g:g + 1, :], 0.0)
            qg = jnp.dot(h.astype(mxu_dtype), whead_ref[g],
                         preferred_element_type=jnp.float32)
            q = qg if q is None else q + qg     # q1 lands in lane 0, q2 in lane 1
        out_ref[...] = (q + bhd_ref[...]).astype(out_ref.dtype)

    return kernel


# ---------------------------------------------------------------------------
# Parameter init (deterministic): xavier_uniform_ weights, zero biases,
# matching nn.init.xavier_uniform_ / nn.init.zeros_ in the PyTorch module.
# Weights stored as (in_features, out_features) so y = x @ W + b.
# ---------------------------------------------------------------------------
def xavier_uniform(key, fan_in, fan_out):
    bound = np.sqrt(6.0 / (fan_in + fan_out))
    return jax.random.uniform(key, (fan_in, fan_out), jnp.float32, -bound, bound)


def init_critic_params(key, obs_dim, action_dim, hidden_dim, hidden_depth):
    in_dim = obs_dim + action_dim
    dims = [in_dim] + [hidden_dim] * hidden_depth + [1]
    params = {"Q1": [], "Q2": []}
    for name in ("Q1", "Q2"):
        for i in range(len(dims) - 1):
            key, sub = jax.random.split(key)
            w = xavier_uniform(sub, dims[i], dims[i + 1])
            b = jnp.zeros((1, dims[i + 1]), jnp.float32)
            params[name].append((w, b))
    return params


# ---------------------------------------------------------------------------
# One-time packing (OUTSIDE the per-call jit).
#   hidden_dim <= 64 : block-diagonal packing, both nets share one 128-lane slab.
#   hidden_dim  > 64 : grouped per-net weights (no half-zero block matrices).
# ---------------------------------------------------------------------------
def pack_critic_params(params, out_w=128, weight_dtype=jnp.float32):
    assert out_w >= 128, "out_w must be lane-dense (>=128); q1=lane0, q2=lane1"
    q1, q2 = params["Q1"], params["Q2"]
    n_layers = len(q1)
    hidden_depth = n_layers - 1
    in_dim, hidden_dim = q1[0][0].shape

    if 2 * hidden_dim <= 128:
        # Block-diagonal packing (tiny nets): padding to 128 lanes dominates anyway.
        hw = 128
        w0 = jnp.zeros((in_dim, hw), jnp.float32)
        w0 = w0.at[:, :hidden_dim].set(q1[0][0])
        w0 = w0.at[:, hidden_dim:2 * hidden_dim].set(q2[0][0])

        wh_list = []
        for i in range(1, n_layers - 1):
            m = jnp.zeros((hw, hw), jnp.float32)
            m = m.at[:hidden_dim, :hidden_dim].set(q1[i][0])
            m = m.at[hidden_dim:2 * hidden_dim, hidden_dim:2 * hidden_dim].set(q2[i][0])
            wh_list.append(m)
        wh = jnp.stack(wh_list) if wh_list else None

        whead = jnp.zeros((hw, out_w), jnp.float32)
        whead = whead.at[:hidden_dim, 0:1].set(q1[-1][0])
        whead = whead.at[hidden_dim:2 * hidden_dim, 1:2].set(q2[-1][0])

        b_hidden = jnp.zeros((hidden_depth, hw), jnp.float32)
        for i in range(hidden_depth):
            b_hidden = b_hidden.at[i, :hidden_dim].set(q1[i][1].reshape(-1))
            b_hidden = b_hidden.at[i, hidden_dim:2 * hidden_dim].set(q2[i][1].reshape(-1))
    else:
        # Grouped per-net packing (realistic widths): half the FLOPs/bytes of block-diag.
        hp = _round_up(hidden_dim, 128)
        w0 = jnp.zeros((2, in_dim, hp), jnp.float32)
        w0 = w0.at[0, :, :hidden_dim].set(q1[0][0])
        w0 = w0.at[1, :, :hidden_dim].set(q2[0][0])

        wh_list = []
        for i in range(1, n_layers - 1):
            m = jnp.zeros((2, hp, hp), jnp.float32)
            m = m.at[0, :hidden_dim, :hidden_dim].set(q1[i][0])
            m = m.at[1, :hidden_dim, :hidden_dim].set(q2[i][0])
            wh_list.append(m)
        wh = jnp.stack(wh_list) if wh_list else None

        whead = jnp.zeros((2, hp, out_w), jnp.float32)
        whead = whead.at[0, :hidden_dim, 0:1].set(q1[-1][0])
        whead = whead.at[1, :hidden_dim, 1:2].set(q2[-1][0])

        b_hidden = jnp.zeros((hidden_depth, 2, hp), jnp.float32)
        for i in range(hidden_depth):
            b_hidden = b_hidden.at[i, 0, :hidden_dim].set(q1[i][1].reshape(-1))
            b_hidden = b_hidden.at[i, 1, :hidden_dim].set(q2[i][1].reshape(-1))

    b_head = jnp.zeros((1, out_w), jnp.float32)
    b_head = b_head.at[0, 0].set(q1[-1][1].reshape(-1)[0])
    b_head = b_head.at[0, 1].set(q2[-1][1].reshape(-1)[0])

    # Optional bf16 MXU-operand path (accumulation stays f32; biases stay f32).
    w0 = w0.astype(weight_dtype)
    wh = wh.astype(weight_dtype) if wh is not None else None
    whead = whead.astype(weight_dtype)

    return {"w0": w0, "wh": wh, "whead": whead,
            "b_hidden": b_hidden, "b_head": b_head}


# ---------------------------------------------------------------------------
# Forward: concat once in XLA, VMEM-budgeted & balanced batch tiles,
# single-buffered VMEM-resident packed weights, lane-dense (B,128) output.
# ---------------------------------------------------------------------------
@functools.partial(jax.jit, static_argnames=("block_b",))
def critic_forward(obs, action, packed, block_b=512):
    w0, wh = packed["w0"], packed["wh"]
    whead, b_hidden, b_head = packed["whead"], packed["b_hidden"], packed["b_head"]

    grouped = (w0.ndim == 3)
    out_w = whead.shape[-1]
    width = whead.shape[-2]                  # per-matmul hidden width (hw or H')
    hidden_depth = b_hidden.shape[0]
    n_hidden = hidden_depth - 1
    mxu_dtype = w0.dtype

    # One-time concat in the wrapper (no lane-axis concat inside the kernel).
    x = jnp.concatenate(
        [obs.astype(jnp.float32), action.astype(jnp.float32)], axis=-1)
    B, in_dim = x.shape

    weights = [w0, whead, b_hidden, b_head] + ([wh] if wh is not None else [])
    weight_bytes = sum(int(np.prod(a.shape)) * a.dtype.itemsize for a in weights)

    # Batch tile from a VMEM budget (weights single-buffered + a few live
    # (tb,width) f32 intermediates + double-buffered x/out tiles), balanced so
    # the padded tail is small, and >=2 grid steps so "parallel" can shard
    # across v7x's two TensorCores.
    vmem_cap = _vmem_capacity_bytes()
    vmem_budget = int(0.6 * vmem_cap)
    bytes_per_row = 4 * (4 * width + 2 * in_dim + 2 * out_w)
    max_tb = max(8, ((vmem_budget - weight_bytes) // max(bytes_per_row, 1)) // 8 * 8)
    tb_cap = max(8, min(block_b, max_tb))

    n_tiles = max(pl.cdiv(B, tb_cap), 2 if B > 8 else 1)
    tb = _round_up(pl.cdiv(B, n_tiles), 8)
    b_pad = _round_up(B, tb)
    if b_pad != B:
        x = jnp.pad(x, ((0, b_pad - B), (0, 0)))
    grid = (b_pad // tb,)

    def const_spec(arr):
        nd = arr.ndim
        # Constant block across all grid steps -> single pipeline buffer.
        return pl.BlockSpec(arr.shape, lambda i: (0,) * nd,
                            pipeline_mode=pl.Buffered(1))

    in_specs = [pl.BlockSpec((tb, in_dim), lambda i: (i, 0)), const_spec(w0)]
    operands = [x, w0]
    if wh is not None:
        in_specs.append(const_spec(wh))
        operands.append(wh)
    in_specs += [const_spec(whead), const_spec(b_hidden), const_spec(b_head)]
    operands += [whead, b_hidden, b_head]

    kernel = (make_grouped_kernel(n_hidden, mxu_dtype) if grouped
              else make_blockdiag_kernel(n_hidden, mxu_dtype))

    n_groups = 2 if grouped else 1
    flops = 2 * b_pad * n_groups * (in_dim * width
                                    + n_hidden * width * width
                                    + width * out_w)
    bytes_accessed = b_pad * in_dim * 4 + weight_bytes + b_pad * out_w * 4

    out = pl.pallas_call(
        kernel,
        out_shape=jax.ShapeDtypeStruct((b_pad, out_w), jnp.float32),
        grid=grid,
        in_specs=in_specs,
        out_specs=pl.BlockSpec((tb, out_w), lambda i: (i, 0)),
        compiler_params=pltpu.CompilerParams(
            dimension_semantics=("parallel",),
            vmem_limit_bytes=int(0.85 * vmem_cap)),
        cost_estimate=pl.CostEstimate(flops=flops, transcendentals=0,
                                      bytes_accessed=bytes_accessed),
    )(*operands)

    return out[:B, 0:1], out[:B, 1:2]


# Pure-JAX reference for correctness (mirrors the PyTorch forward).
def critic_forward_ref(obs, action, params):
    x = jnp.concatenate([obs, action], axis=-1)

    def run(plist):
        h = x
        for i, (w, b) in enumerate(plist):
            h = h @ w + b
            if i < len(plist) - 1:
                h = jnp.maximum(h, 0.0)
        return h

    return run(params["Q1"]), run(params["Q2"])


if __name__ == "__main__":
    key = jax.random.PRNGKey(0)

    configs = [
        # (batch, obs_dim, action_dim, hidden_dim, hidden_depth)
        (8, 24, 8, 32, 2),     # block-diagonal packing path, single grid step
        (12, 24, 8, 128, 2),   # grouped packing path, batch padding, 2 grid steps
    ]
    for (batch, obs_dim, action_dim, hidden_dim, hidden_depth) in configs:
        key, k_obs, k_act, k_params = jax.random.split(key, 4)
        obs = jax.random.normal(k_obs, (batch, obs_dim), jnp.float32)
        action = jax.random.normal(k_act, (batch, action_dim), jnp.float32)
        params = init_critic_params(k_params, obs_dim, action_dim,
                                    hidden_dim, hidden_depth)

        packed = pack_critic_params(params)         # packed ONCE, outside the jit
        q1, q2 = critic_forward(obs, action, packed)
        q1 = jax.block_until_ready(q1)
        q2 = jax.block_until_ready(q2)

        q1_ref, q2_ref = critic_forward_ref(obs, action, params)
        np.testing.assert_allclose(np.asarray(q1), np.asarray(q1_ref),
                                   rtol=1e-5, atol=1e-5)
        np.testing.assert_allclose(np.asarray(q2), np.asarray(q2_ref),
                                   rtol=1e-5, atol=1e-5)

    # Flag-gated bf16 MXU-operand path (perf option; not bit-exact with f32).
    packed_bf16 = pack_critic_params(params, weight_dtype=jnp.bfloat16)
    q1b, q2b = critic_forward(obs, action, packed_bf16)
    jax.block_until_ready((q1b, q2b))
    np.testing.assert_allclose(np.asarray(q1b), np.asarray(q1_ref), rtol=0.1, atol=0.1)
    np.testing.assert_allclose(np.asarray(q2b), np.asarray(q2_ref), rtol=0.1, atol=0.1)

    print("KERNEL_OK")
</pallas_src>

<mosaic_0001>
module attributes {stable_mosaic.version = 11 : i64} {
  func.func @kernel(%arg0: i32, %arg1: memref<8x32xf32, #tpu.memory_space<vmem>>, %arg2: memref<32x128xf32, #tpu.memory_space<vmem>>, %arg3: memref<1x128x128xf32, #tpu.memory_space<vmem>>, %arg4: memref<128x128xf32, #tpu.memory_space<vmem>>, %arg5: memref<2x128xf32, #tpu.memory_space<vmem>>, %arg6: memref<1x128xf32, #tpu.memory_space<vmem>>, %arg7: memref<8x128xf32, #tpu.memory_space<vmem>>) attributes {dimension_semantics = [#tpu.dimension_semantics<parallel>], iteration_bounds = array<i64: 1>, scalar_prefetch = 0 : i64, scratch_operands = 0 : i64, tpu.core_type = #tpu.core_type<tc>, window_params = [{transform_indices = @transform_0, window_bounds = array<i64: 8, 32>}, {pipeline_mode = #tpu.pipeline_mode<synchronous>, transform_indices = @transform_1, window_bounds = array<i64: 32, 128>}, {pipeline_mode = #tpu.pipeline_mode<synchronous>, transform_indices = @transform_2, window_bounds = array<i64: 1, 128, 128>}, {pipeline_mode = #tpu.pipeline_mode<synchronous>, transform_indices = @transform_3, window_bounds = array<i64: 128, 128>}, {pipeline_mode = #tpu.pipeline_mode<synchronous>, transform_indices = @transform_4, window_bounds = array<i64: 2, 128>}, {pipeline_mode = #tpu.pipeline_mode<synchronous>, transform_indices = @transform_5, window_bounds = array<i64: 1, 128>}, {transform_indices = @transform_6, window_bounds = array<i64: 8, 128>}]} {
    %c0 = arith.constant 0 : index
    %c0_0 = arith.constant 0 : index
    %0 = vector.load %arg1[%c0, %c0_0] : memref<8x32xf32, #tpu.memory_space<vmem>>, vector<8x32xf32>
    %c0_1 = arith.constant 0 : index
    %c0_2 = arith.constant 0 : index
    %1 = vector.load %arg2[%c0_1, %c0_2] : memref<32x128xf32, #tpu.memory_space<vmem>>, vector<32x128xf32>
    %cst = arith.constant dense<0.000000e+00> : vector<8x128xf32>
    %2 = tpu.matmul %0, %1, %cst {dimension_numbers = #tpu.dot_dimension_numbers<[1], [0], [0], [1], [0, 0, 1, 1], [], []>} : vector<8x32xf32>, vector<32x128xf32>, vector<8x128xf32> -> vector<8x128xf32>
    %c0_3 = arith.constant 0 : index
    %c0_4 = arith.constant 0 : index
    %3 = vector.load %arg5[%c0_3, %c0_4] : memref<2x128xf32, #tpu.memory_space<vmem>>, vector<1x128xf32>
    %4 = vector.broadcast %3 : vector<1x128xf32> to vector<8x128xf32>
    %5 = arith.addf %2, %4 : vector<8x128xf32>
    %cst_5 = arith.constant 0.000000e+00 : f32
    %6 = vector.broadcast %cst_5 : f32 to vector<8x128xf32>
    %7 = arith.maximumf %5, %6 : vector<8x128xf32>
    %c0_6 = arith.constant 0 : index
    %c0_7 = arith.constant 0 : index
    %c0_8 = arith.constant 0 : index
    %8 = vector.load %arg3[%c0_6, %c0_7, %c0_8] : memref<1x128x128xf32, #tpu.memory_space<vmem>>, vector<1x128x128xf32>
    %9 = vector.shape_cast %8 : vector<1x128x128xf32> to vector<128x128xf32>
    %cst_9 = arith.constant dense<0.000000e+00> : vector<8x128xf32>
    %10 = tpu.matmul %7, %9, %cst_9 {dimension_numbers = #tpu.dot_dimension_numbers<[1], [0], [0], [1], [0, 0, 1, 1], [], []>} : vector<8x128xf32>, vector<128x128xf32>, vector<8x128xf32> -> vector<8x128xf32>
    %c1 = arith.constant 1 : index
    %c0_10 = arith.constant 0 : index
    %11 = vector.load %arg5[%c1, %c0_10] : memref<2x128xf32, #tpu.memory_space<vmem>>, vector<1x128xf32>
    %12 = vector.broadcast %11 : vector<1x128xf32> to vector<8x128xf32>
    %13 = arith.addf %10, %12 : vector<8x128xf32>
    %cst_11 = arith.constant 0.000000e+00 : f32
    %14 = vector.broadcast %cst_11 : f32 to vector<8x128xf32>
    %15 = arith.maximumf %13, %14 : vector<8x128xf32>
    %c0_12 = arith.constant 0 : index
    %c0_13 = arith.constant 0 : index
    %16 = vector.load %arg4[%c0_12, %c0_13] : memref<128x128xf32, #tpu.memory_space<vmem>>, vector<128x128xf32>
    %cst_14 = arith.constant dense<0.000000e+00> : vector<8x128xf32>
    %17 = tpu.matmul %15, %16, %cst_14 {dimension_numbers = #tpu.dot_dimension_numbers<[1], [0], [0], [1], [0, 0, 1, 1], [], []>} : vector<8x128xf32>, vector<128x128xf32>, vector<8x128xf32> -> vector<8x128xf32>
    %c0_15 = arith.constant 0 : index
    %c0_16 = arith.constant 0 : index
    %18 = vector.load %arg6[%c0_15, %c0_16] : memref<1x128xf32, #tpu.memory_space<vmem>>, vector<1x128xf32>
    %19 = vector.broadcast %18 : vector<1x128xf32> to vector<8x128xf32>
    %20 = arith.addf %17, %19 : vector<8x128xf32>
    %c0_17 = arith.constant 0 : index
    %c0_18 = arith.constant 0 : index
    %21 = vector.load %arg7[%c0_17, %c0_18] : memref<8x128xf32, #tpu.memory_space<vmem>>, vector<8x128xf32>
    tpu.vector_store %arg7[%c0_17, %c0_18], %20 {strides = array<i32>} : memref<8x128xf32, #tpu.memory_space<vmem>>, vector<8x128xf32>,
    return
  }
  func.func @transform_0(%arg0: i32) -> (i32, i32) {
    %c0_i32 = arith.constant 0 : i32
    %c0_i32_0 = arith.constant 0 : i32
    return %arg0, %c0_i32 : i32, i32
  }
  func.func @transform_1(%arg0: i32) -> (i32, i32) {
    %c0_i32 = arith.constant 0 : i32
    %c0_i32_0 = arith.constant 0 : i32
    %c0_i32_1 = arith.constant 0 : i32
    return %c0_i32, %c0_i32_0 : i32, i32
  }
  func.func @transform_2(%arg0: i32) -> (i32, i32, i32) {
    %c0_i32 = arith.constant 0 : i32
    %c0_i32_0 = arith.constant 0 : i32
    %c0_i32_1 = arith.constant 0 : i32
    %c0_i32_2 = arith.constant 0 : i32
    return %c0_i32, %c0_i32_0, %c0_i32_1 : i32, i32, i32
  }
  func.func @transform_3(%arg0: i32) -> (i32, i32) {
    %c0_i32 = arith.constant 0 : i32
    %c0_i32_0 = arith.constant 0 : i32
    %c0_i32_1 = arith.constant 0 : i32
    return %c0_i32, %c0_i32_0 : i32, i32
  }
  func.func @transform_4(%arg0: i32) -> (i32, i32) {
    %c0_i32 = arith.constant 0 : i32
    %c0_i32_0 = arith.constant 0 : i32
    %c0_i32_1 = arith.constant 0 : i32
    return %c0_i32, %c0_i32_0 : i32, i32
  }
  func.func @transform_5(%arg0: i32) -> (i32, i32) {
    %c0_i32 = arith.constant 0 : i32
    %c0_i32_0 = arith.constant 0 : i32
    %c0_i32_1 = arith.constant 0 : i32
    return %c0_i32, %c0_i32_0 : i32, i32
  }
  func.func @transform_6(%arg0: i32) -> (i32, i32) {
    %c0_i32 = arith.constant 0 : i32
    %c0_i32_0 = arith.constant 0 : i32
    return %arg0, %c0_i32 : i32, i32
  }
}

</mosaic_0001>

<llo_original>
// kernel: critic_forward.1
$region0: #{critic_forward.1}
  #allocation0 [shape = 'u32[]', space=smem, size = 0x4, offset = 0x4, fixed_abs, tag = 'smem constant byte address 0x4 - core index']
  #allocation1 [shape = 'u32[144,128]{1,0:T(1,128)}', space=vmem, size = 0x12000, scoped, tag = 'internal scratch']
  %s0 = inlined_call_operand.vmem [shape: f32[8,32], index: 0, kind: input, shape index: {}]
  %s1 = inlined_call_operand.hbm [shape: f32[32,128], index: 1, kind: input, shape index: {}]
  %s2 = inlined_call_operand.hbm [shape: f32[1,128,128], index: 2, kind: input, shape index: {}]
  %s3 = inlined_call_operand.hbm [shape: f32[128,128], index: 3, kind: input, shape index: {}]
  %s4 = inlined_call_operand.vmem [shape: f32[2,128], index: 4, kind: input, shape index: {}]
  %s5 = inlined_call_operand.vmem [shape: f32[1,128], index: 5, kind: input, shape index: {}]
  %s6 = inlined_call_operand.vmem [shape: f32[8,128], index: 6, kind: output, shape index: {}]
  %s7 = sld [smem:[#allocation0]]
  $region46: #{critic_forward.1} parent=0
    _
  %s9 = ssub.s32 1, %s7
  %s10 = scalar_select 0, %s9, %s7
  $region1: #{critic_forward.1} parent=0
    #allocation2 [shape = 'u8[16384]{0}', space=vmem, size = 0x4000, scoped, tag = 'input window, operand 1, single buffered']
    #allocation3 [shape = 's32[1]{0}', space=sflag, size = 0x4, scoped, tag = 'scoped memory for critic_forward.1']
    #allocation4 [shape = 'u8[65536]{0}', space=vmem, size = 0x10000, scoped, tag = 'input window, operand 2, single buffered']
    #allocation5 [shape = 's32[1]{0}', space=sflag, size = 0x4, scoped, tag = 'scoped memory for critic_forward.1']
    #allocation6 [shape = 'u8[65536]{0}', space=vmem, size = 0x10000, scoped, tag = 'input window, operand 3, single buffered']
    %11 = vsyncpa [#allocation3], 0
    %12 = vsyncpa [#allocation5], 0
    // Predicated region
    $region2: #{critic_forward.1} parent=1 // pred_check
      _
    $region3: #{critic_forward.1} parent=1 // pred_check_branch
      %14 = sbr.rel (0) target = $region5
    $region4: #{critic_forward.1} parent=1 // pred_region
      _
    $region5: #{critic_forward.1} parent=1 // pred_fallthru
      _
    // Predicated region
    $region6: #{critic_forward.1} parent=1 // pred_check
      _
    $region7: #{critic_forward.1} parent=1 // pred_check_branch
      %16 = sbr.rel (0) target = $region9
    $region8: #{critic_forward.1} parent=1 // pred_region
      %s18 = ssub.s32 512, 512
      %19 = vsyncadd [#allocation3], %s18
      %s20 = sshll.u32 [#allocation2], 4
      %s21 = int_to_ptr.vmem [resolvable:$true] %s20
      %26 = dma.hbm_to_vmem [thread:$0]  %s1, 512, %s21, [#allocation3], 128, 128, 8
    $region9: #{critic_forward.1} parent=1 // pred_fallthru
      _
    // Predicated region
    $region10: #{critic_forward.1} parent=1 // pred_check
      _
    $region11: #{critic_forward.1} parent=1 // pred_check_branch
      %28 = sbr.rel (0) target = $region13
    $region12: #{critic_forward.1} parent=1 // pred_region
      %s30 = ssub.s32 2048, 2048
      %31 = vsyncadd [#allocation5], %s30
      %s32 = sshll.u32 [#allocation4], 4
      %s33 = int_to_ptr.vmem [resolvable:$true] %s32
      %38 = dma.hbm_to_vmem [thread:$0]  %s2, 2048, %s33, [#allocation5], 128, 128, 8
    $region13: #{critic_forward.1} parent=1 // pred_fallthru
      _
    // Predicated region
    $region14: #{critic_forward.1} parent=1 // pred_check
      _
    $region15: #{critic_forward.1} parent=1 // pred_check_branch
      %40 = sbr.rel (0) target = $region17
    $region16: #{critic_forward.1} parent=1 // pred_region
      %s42 = ssub.s32 2048, 2048
      %43 = vsyncadd [#allocation5], %s42
      %s44 = sshll.u32 [#allocation6], 4
      %s45 = int_to_ptr.vmem [resolvable:$true] %s44
      %50 = dma.hbm_to_vmem [thread:$0]  %s3, 2048, %s45, [#allocation5], 128, 128, 8
    $region17: #{critic_forward.1} parent=1 // pred_fallthru
      _
    // Predicated region
    $region18: #{critic_forward.1} parent=1 // pred_check
      _
    $region19: #{critic_forward.1} parent=1 // pred_check_branch
      %52 = sbr.rel (0) target = $region21
    $region20: #{critic_forward.1} parent=1 // pred_region
      _
    $region21: #{critic_forward.1} parent=1 // pred_fallthru
      _
    // Predicated region
    $region22: #{critic_forward.1} parent=1 // pred_check
      _
    $region23: #{critic_forward.1} parent=1 // pred_check_branch
      %54 = sbr.rel (0) target = $region25
    $region24: #{critic_forward.1} parent=1 // pred_region
      _
    $region25: #{critic_forward.1} parent=1 // pred_fallthru
      _
    // Predicated region
    $region26: #{critic_forward.1} parent=1 // pred_check
      _
    $region27: #{critic_forward.1} parent=1 // pred_check_branch
      %56 = sbr.rel (0) target = $region29
    $region28: #{critic_forward.1} parent=1 // pred_region
      %57 = dma.done [#allocation3], 512
    $region29: #{critic_forward.1} parent=1 // pred_fallthru
      _
    // Predicated region
    $region30: #{critic_forward.1} parent=1 // pred_check
      _
    $region31: #{critic_forward.1} parent=1 // pred_check_branch
      %59 = sbr.rel (0) target = $region33
    $region32: #{critic_forward.1} parent=1 // pred_region
      %60 = dma.done [#allocation5], 2048
    $region33: #{critic_forward.1} parent=1 // pred_fallthru
      _
    // Predicated region
    $region34: #{critic_forward.1} parent=1 // pred_check
      _
    $region35: #{critic_forward.1} parent=1 // pred_check_branch
      %62 = sbr.rel (0) target = $region37
    $region36: #{critic_forward.1} parent=1 // pred_region
      %63 = dma.done [#allocation5], 2048
    $region37: #{critic_forward.1} parent=1 // pred_fallthru
      _
    %v64 = vld [vmem:[%s0] sm:$0xff]
    %v65 = vld [vmem:[#allocation2] sm:$0xff]
    %v66 = vld [vmem:[#allocation2 + $0x8] sm:$0xff]
    %v67 = vld [vmem:[#allocation2 + $0x10] sm:$0xff]
    %v68 = vld [vmem:[#allocation2 + $0x18] sm:$0xff]
    %v69 = vld [vmem:[%s4] sm:$0x1]
    %v70 = vlaneseq
    %v71 = vshrl.u32 %v70, 7
    %v72 = vsub.s32 0, %v71
    %v73 = vrot.slane %v69, %v72
    %vm74 = vcmask 261120
    %v76 = vsel %vm74, %v64, 0
    %78 = vmatprep.subr.mxu0 0.0
    %79 = vmatpush1.msra.mxu0 0.0
    %80 = vmatprep.subr.mxu0 0.0
    %81 = vmatpush1.msra.mxu0 0.0
    %82 = vmatprep.subr.mxu0 0.0
    %83 = vmatpush1.msra.mxu0 0.0
    %84 = vmatprep.subr.mxu0 0.0
    %85 = vmatpush1.msra.mxu0 0.0
    %86 = vmatprep.subr.mxu0 0.0
    %87 = vmatpush1.msra.mxu0 0.0
    %88 = vmatprep.subr.mxu0 0.0
    %89 = vmatpush1.msra.mxu0 0.0
    %90 = vmatprep.subr.mxu0 0.0
    %91 = vmatpush1.msra.mxu0 0.0
    %92 = vmatprep.subr.mxu0 0.0
    %93 = vmatpush1.msra.mxu0 0.0
    %94 = vmatprep.subr.mxu0 0.0
    %95 = vmatpush1.msra.mxu0 0.0
    %96 = vmatprep.subr.mxu0 0.0
    %97 = vmatpush1.msra.mxu0 0.0
    %98 = vmatprep.subr.mxu0 0.0
    %99 = vmatpush1.msra.mxu0 0.0
    %100 = vmatprep.subr.mxu0 0.0
    %101 = vmatpush1.msra.mxu0 0.0
    %102 = vmatprep.subr.mxu0 0.0
    %103 = vmatpush1.msra.mxu0 %v68
    %104 = vmatprep.subr.mxu0 0.0
    %105 = vmatpush1.msra.mxu0 %v67
    %106 = vmatprep.subr.mxu0 0.0
    %107 = vmatpush1.msra.mxu0 %v66
    %108 = vmatprep.subr.mxu0 0.0
    %109 = vmatpush1.msra.mxu0 %v65
    %110 = vmatprep.subr.mxu0 0.0
    %111 = vmatpush2.msra.mxu0 0.0
    %112 = vmatprep.subr.mxu0 0.0
    %113 = vmatpush2.msra.mxu0 0.0
    %114 = vmatprep.subr.mxu0 0.0
    %115 = vmatpush2.msra.mxu0 0.0
    %116 = vmatprep.subr.mxu0 0.0
    %117 = vmatpush2.msra.mxu0 0.0
    %118 = vmatprep.subr.mxu0 0.0
    %119 = vmatpush2.msra.mxu0 0.0
    %120 = vmatprep.subr.mxu0 0.0
    %121 = vmatpush2.msra.mxu0 0.0
    %122 = vmatprep.subr.mxu0 0.0
    %123 = vmatpush2.msra.mxu0 0.0
    %124 = vmatprep.subr.mxu0 0.0
    %125 = vmatpush2.msra.mxu0 0.0
    %126 = vmatprep.subr.mxu0 0.0
    %127 = vmatpush2.msra.mxu0 0.0
    %128 = vmatprep.subr.mxu0 0.0
    %129 = vmatpush2.msra.mxu0 0.0
    %130 = vmatprep.subr.mxu0 0.0
    %131 = vmatpush2.msra.mxu0 0.0
    %132 = vmatprep.subr.mxu0 0.0
    %133 = vmatpush2.msra.mxu0 0.0
    %134 = vmatprep.subr.mxu0 0.0
    %135 = vmatpush2.msra.mxu0 0.0
    %136 = vmatprep.subr.mxu0 0.0
    %137 = vmatpush2.msra.mxu0 0.0
    %138 = vmatprep.subr.mxu0 0.0
    %139 = vmatpush2.msra.mxu0 0.0
    %140 = vmatprep.subr.mxu0 0.0
    %141 = vmatpush2.msra.mxu0 0.0
    %142 = vmatprep.mubr.f32.mxu0 0.0
    %143 = vmatmul.mubr.f32.gmra.mxu0 %v76
    %v144 = vpop.f32.mrf.mxu0
    %v145 = vadd.f32 %v73, %v144
    %v146 = vpop.f32.mrf.mxu0
    %147 = vdwg.mxu0
    %v148 = vmax.f32 %v145, 0.0
    %v149 = vld [vmem:[#allocation4] sm:$0xff]
    %v150 = vld [vmem:[#allocation4 + $0x8] sm:$0xff]
    %v151 = vld [vmem:[#allocation4 + $0x10] sm:$0xff]
    %v152 = vld [vmem:[#allocation4 + $0x18] sm:$0xff]
    %v153 = vld [vmem:[#allocation4 + $0x20] sm:$0xff]
    %v154 = vld [vmem:[#allocation4 + $0x28] sm:$0xff]
    %v155 = vld [vmem:[#allocation4 + $0x30] sm:$0xff]
    %v156 = vld [vmem:[#allocation4 + $0x38] sm:$0xff]
    %v157 = vld [vmem:[#allocation4 + $0x40] sm:$0xff]
    %v158 = vld [vmem:[#allocation4 + $0x48] sm:$0xff]
    %v159 = vld [vmem:[#allocation4 + $0x50] sm:$0xff]
    %v160 = vld [vmem:[#allocation4 + $0x58] sm:$0xff]
    %v161 = vld [vmem:[#allocation4 + $0x60] sm:$0xff]
    %v162 = vld [vmem:[#allocation4 + $0x68] sm:$0xff]
    %v163 = vld [vmem:[#allocation4 + $0x70] sm:$0xff]
    %v164 = vld [vmem:[#allocation4 + $0x78] sm:$0xff]
    %v165 = vld [vmem:[%s4 + $0x1] sm:$0x1]
    %v166 = vlaneseq
    %v167 = vshrl.u32 %v166, 7
    %v168 = vsub.s32 0, %v167
    %v169 = vrot.slane %v165, %v168
    %170 = vmatprep.subr.mxu0 0.0
    %171 = vmatpush1.msra.mxu0 %v164
    %172 = vmatprep.subr.mxu0 0.0
    %173 = vmatpush1.msra.mxu0 %v163
    %174 = vmatprep.subr.mxu0 0.0
    %175 = vmatpush1.msra.mxu0 %v162
    %176 = vmatprep.subr.mxu0 0.0
    %177 = vmatpush1.msra.mxu0 %v161
    %178 = vmatprep.subr.mxu0 0.0
    %179 = vmatpush1.msra.mxu0 %v160
    %180 = vmatprep.subr.mxu0 0.0
    %181 = vmatpush1.msra.mxu0 %v159
    %182 = vmatprep.subr.mxu0 0.0
    %183 = vmatpush1.msra.mxu0 %v158
    %184 = vmatprep.subr.mxu0 0.0
    %185 = vmatpush1.msra.mxu0 %v157
    %186 = vmatprep.subr.mxu0 0.0
    %187 = vmatpush1.msra.mxu0 %v156
    %188 = vmatprep.subr.mxu0 0.0
    %189 = vmatpush1.msra.mxu0 %v155
    %190 = vmatprep.subr.mxu0 0.0
    %191 = vmatpush1.msra.mxu0 %v154
    %192 = vmatprep.subr.mxu0 0.0
    %193 = vmatpush1.msra.mxu0 %v153
    %194 = vmatprep.subr.mxu0 0.0
    %195 = vmatpush1.msra.mxu0 %v152
    %196 = vmatprep.subr.mxu0 0.0
    %197 = vmatpush1.msra.mxu0 %v151
    %198 = vmatprep.subr.mxu0 0.0
    %199 = vmatpush1.msra.mxu0 %v150
    %200 = vmatprep.subr.mxu0 0.0
    %201 = vmatpush1.msra.mxu0 %v149
    %202 = vmatprep.subr.mxu0 0.0
    %203 = vmatpush2.msra.mxu0 0.0
    %204 = vmatprep.subr.mxu0 0.0
    %205 = vmatpush2.msra.mxu0 0.0
    %206 = vmatprep.subr.mxu0 0.0
    %207 = vmatpush2.msra.mxu0 0.0
    %208 = vmatprep.subr.mxu0 0.0
    %209 = vmatpush2.msra.mxu0 0.0
    %210 = vmatprep.subr.mxu0 0.0
    %211 = vmatpush2.msra.mxu0 0.0
    %212 = vmatprep.subr.mxu0 0.0
    %213 = vmatpush2.msra.mxu0 0.0
    %214 = vmatprep.subr.mxu0 0.0
    %215 = vmatpush2.msra.mxu0 0.0
    %216 = vmatprep.subr.mxu0 0.0
    %217 = vmatpush2.msra.mxu0 0.0
    %218 = vmatprep.subr.mxu0 0.0
    %219 = vmatpush2.msra.mxu0 0.0
    %220 = vmatprep.subr.mxu0 0.0
    %221 = vmatpush2.msra.mxu0 0.0
    %222 = vmatprep.subr.mxu0 0.0
    %223 = vmatpush2.msra.mxu0 0.0
    %224 = vmatprep.subr.mxu0 0.0
    %225 = vmatpush2.msra.mxu0 0.0
    %226 = vmatprep.subr.mxu0 0.0
    %227 = vmatpush2.msra.mxu0 0.0
    %228 = vmatprep.subr.mxu0 0.0
    %229 = vmatpush2.msra.mxu0 0.0
    %230 = vmatprep.subr.mxu0 0.0
    %231 = vmatpush2.msra.mxu0 0.0
    %232 = vmatprep.subr.mxu0 0.0
    %233 = vmatpush2.msra.mxu0 0.0
    %234 = vmatprep.mubr.f32.mxu0 0.0
    %235 = vmatmul.mubr.f32.gmra.mxu0 %v148
    %v236 = vpop.f32.mrf.mxu0
    %v237 = vadd.f32 %v169, %v236
    %v238 = vpop.f32.mrf.mxu0
    %239 = vdwg.mxu0
    %v240 = vmax.f32 %v237, 0.0
    %v241 = vld [vmem:[#allocation6] sm:$0xff]
    %v242 = vld [vmem:[#allocation6 + $0x8] sm:$0xff]
    %v243 = vld [vmem:[#allocation6 + $0x10] sm:$0xff]
    %v244 = vld [vmem:[#allocation6 + $0x18] sm:$0xff]
    %v245 = vld [vmem:[#allocation6 + $0x20] sm:$0xff]
    %v246 = vld [vmem:[#allocation6 + $0x28] sm:$0xff]
    %v247 = vld [vmem:[#allocation6 + $0x30] sm:$0xff]
    %v248 = vld [vmem:[#allocation6 + $0x38] sm:$0xff]
    %v249 = vld [vmem:[#allocation6 + $0x40] sm:$0xff]
    %v250 = vld [vmem:[#allocation6 + $0x48] sm:$0xff]
    %v251 = vld [vmem:[#allocation6 + $0x50] sm:$0xff]
    %v252 = vld [vmem:[#allocation6 + $0x58] sm:$0xff]
    %v253 = vld [vmem:[#allocation6 + $0x60] sm:$0xff]
    %v254 = vld [vmem:[#allocation6 + $0x68] sm:$0xff]
    %v255 = vld [vmem:[#allocation6 + $0x70] sm:$0xff]
    %v256 = vld [vmem:[#allocation6 + $0x78] sm:$0xff]
    %v257 = vld [vmem:[%s5] sm:$0x1]
    %v259 = vlaneseq
    %v260 = vshrl.u32 %v259, 7
    %v261 = vsub.s32 0, %v260
    %v262 = vrot.slane %v257, %v261
    %264 = vmatprep.subr.mxu0 0.0
    %265 = vmatpush1.msra.mxu0 %v256
    %266 = vmatprep.subr.mxu0 0.0
    %267 = vmatpush1.msra.mxu0 %v255
    %268 = vmatprep.subr.mxu0 0.0
    %269 = vmatpush1.msra.mxu0 %v254
    %270 = vmatprep.subr.mxu0 0.0
    %271 = vmatpush1.msra.mxu0 %v253
    %272 = vmatprep.subr.mxu0 0.0
    %273 = vmatpush1.msra.mxu0 %v252
    %274 = vmatprep.subr.mxu0 0.0
    %275 = vmatpush1.msra.mxu0 %v251
    %276 = vmatprep.subr.mxu0 0.0
    %277 = vmatpush1.msra.mxu0 %v250
    %278 = vmatprep.subr.mxu0 0.0
    %279 = vmatpush1.msra.mxu0 %v249
    %280 = vmatprep.subr.mxu0 0.0
    %281 = vmatpush1.msra.mxu0 %v248
    %282 = vmatprep.subr.mxu0 0.0
    %283 = vmatpush1.msra.mxu0 %v247
    %284 = vmatprep.subr.mxu0 0.0
    %285 = vmatpush1.msra.mxu0 %v246
    %286 = vmatprep.subr.mxu0 0.0
    %287 = vmatpush1.msra.mxu0 %v245
    %288 = vmatprep.subr.mxu0 0.0
    %289 = vmatpush1.msra.mxu0 %v244
    %290 = vmatprep.subr.mxu0 0.0
    %291 = vmatpush1.msra.mxu0 %v243
    %292 = vmatprep.subr.mxu0 0.0
    %293 = vmatpush1.msra.mxu0 %v242
    %294 = vmatprep.subr.mxu0 0.0
    %295 = vmatpush1.msra.mxu0 %v241
    %296 = vmatprep.subr.mxu0 0.0
    %297 = vmatpush2.msra.mxu0 0.0
    %298 = vmatprep.subr.mxu0 0.0
    %299 = vmatpush2.msra.mxu0 0.0
    %300 = vmatprep.subr.mxu0 0.0
    %301 = vmatpush2.msra.mxu0 0.0
    %302 = vmatprep.subr.mxu0 0.0
    %303 = vmatpush2.msra.mxu0 0.0
    %304 = vmatprep.subr.mxu0 0.0
    %305 = vmatpush2.msra.mxu0 0.0
    %306 = vmatprep.subr.mxu0 0.0
    %307 = vmatpush2.msra.mxu0 0.0
    %308 = vmatprep.subr.mxu0 0.0
    %309 = vmatpush2.msra.mxu0 0.0
    %310 = vmatprep.subr.mxu0 0.0
    %311 = vmatpush2.msra.mxu0 0.0
    %312 = vmatprep.subr.mxu0 0.0
    %313 = vmatpush2.msra.mxu0 0.0
    %314 = vmatprep.subr.mxu0 0.0
    %315 = vmatpush2.msra.mxu0 0.0
    %316 = vmatprep.subr.mxu0 0.0
    %317 = vmatpush2.msra.mxu0 0.0
    %318 = vmatprep.subr.mxu0 0.0
    %319 = vmatpush2.msra.mxu0 0.0
    %320 = vmatprep.subr.mxu0 0.0
    %321 = vmatpush2.msra.mxu0 0.0
    %322 = vmatprep.subr.mxu0 0.0
    %323 = vmatpush2.msra.mxu0 0.0
    %324 = vmatprep.subr.mxu0 0.0
    %325 = vmatpush2.msra.mxu0 0.0
    %326 = vmatprep.subr.mxu0 0.0
    %327 = vmatpush2.msra.mxu0 0.0
    %328 = vmatprep.mubr.f32.mxu0 0.0
    %329 = vmatmul.mubr.f32.gmra.mxu0 %v240
    %v330 = vpop.f32.mrf.mxu0
    %v331 = vadd.f32 %v262, %v330
    %v332 = vpop.f32.mrf.mxu0
    %333 = vdwg.mxu0
    %334 = vst [vmem:[%s6] sm:$0xff] %v331
    // Predicated region
    $region38: #{critic_forward.1} parent=1 // pred_check
      _
    $region39: #{critic_forward.1} parent=1 // pred_check_branch
      %336 = sbr.rel (0) target = $region41
    $region40: #{critic_forward.1} parent=1 // pred_region
      _
    $region41: #{critic_forward.1} parent=1 // pred_fallthru
      _
    // Predicated region
    $region42: #{critic_forward.1} parent=1 // pred_check
      _
    $region43: #{critic_forward.1} parent=1 // pred_check_branch
      %338 = sbr.rel (0) target = $region45
    $region44: #{critic_forward.1} parent=1 // pred_region
      _
    $region45: #{critic_forward.1} parent=1 // pred_fallthru
      _
    %339 = vsyncpa [#allocation3], 1
    %340 = vsyncpa [#allocation5], 1

</llo_original>
